<compile_context>
chip_gen: v7x
topology: tpu7x:2x2x1
jax: 0.10.0
libtpu: 0.0.40
codegen_flags: <defaults>
</compile_context>

<pallas_src>
import functools

import jax
import jax.numpy as jnp
from jax.experimental import pallas as pl
from jax.experimental.pallas import tpu as pltpu


# --------------------------------------------------------------------------
# Kernels
# --------------------------------------------------------------------------
def _fused_hops_kernel(adj_ref, seq_ref, out_ref, *, hops):
    """Whole-problem-in-VMEM path: all propagation hops fused in one kernel."""
    a = adj_ref[...]
    x = seq_ref[...]
    dt = x.dtype
    for _ in range(hops):  # hops is a small static int -> unrolled
        x = jnp.dot(a, x, preferred_element_type=jnp.float32).astype(dt)
    out_ref[...] = x.astype(out_ref.dtype)


def _mm_kernel_nok(adj_ref, seq_ref, out_ref):
    """No-reduction-axis variant: adj row strip (tm, K) x resident seq (K, F)."""
    out_ref[...] = jnp.dot(
        adj_ref[...], seq_ref[...], preferred_element_type=jnp.float32
    ).astype(out_ref.dtype)


def _mm_kernel_accum_out(adj_ref, seq_ref, out_ref):
    """out(i,j) = sum_k adj(i,k) @ seq(k,j); accumulate directly in out_ref (f32)."""
    k = pl.program_id(2)

    @pl.when(k == 0)
    def _():
        out_ref[...] = jnp.zeros_like(out_ref)

    out_ref[...] += jnp.dot(
        adj_ref[...], seq_ref[...], preferred_element_type=jnp.float32
    )


def _mm_kernel_scratch(adj_ref, seq_ref, out_ref, acc_ref):
    """Same as above but with an f32 scratch accumulator (for non-f32 outputs)."""
    k = pl.program_id(2)

    @pl.when(k == 0)
    def _():
        acc_ref[...] = jnp.zeros_like(acc_ref)

    acc_ref[...] += jnp.dot(
        adj_ref[...], seq_ref[...], preferred_element_type=jnp.float32
    )

    @pl.when(k == pl.num_programs(2) - 1)
    def _():
        out_ref[...] = acc_ref[...].astype(out_ref.dtype)


# --------------------------------------------------------------------------
# Planning helpers
# --------------------------------------------------------------------------
def _round_up(x, m):
    return ((x + m - 1) // m) * m


def _vmem_capacity_bytes():
    """Per-TensorCore VMEM capacity; conservative fallback (v7x = 64 MiB)."""
    try:
        info = pltpu.get_tpu_info()
        for attr in ("vmem_capacity_bytes", "vmem_size_bytes", "vmem_bytes"):
            cap = getattr(info, attr, None)
            if cap:
                return int(cap)
    except Exception:
        pass
    return 64 * 1024 * 1024


def _plan_tiles(N, F, adj_isize, seq_isize, vmem_cap):
    """Pick the tiled-path variant + tile sizes + padded dims (all static)."""
    f_pad = _round_up(F, 128)
    # Round N to 512 only when the relative padding is small (or N is large).
    if N >= 8192 or (_round_up(N, 512) - N) <= max(N // 16, 0):
        n_mult = 512
    else:
        n_mult = 256
    n_pad = _round_up(N, n_mult)

    budget = min(int(vmem_cap * 0.6), 80 << 20)
    vmem_limit = int(min(vmem_cap * 0.8, 100 << 20))

    # ---- Variant "nok": no reduction axis.  adj streamed once per hop as
    #      (tm, n_pad) strips; seq fully resident (grid-invariant BlockSpec,
    #      DMA'd once per hop).  Prefer i-grid >= 2 so both v7x TCs work.
    #      (pipeline_mode=pl.Buffered(1) on the seq spec would halve its VMEM
    #       allocation; default double-buffering is kept and budgeted for.)
    for tm in (512, 256, 128):
        if n_pad % tm:
            continue
        if n_pad // tm < 2 and tm > 128:
            continue
        est = (2 * tm * n_pad * adj_isize        # adj strip, double-buffered
               + 2 * n_pad * f_pad * seq_isize   # resident seq (2 bufs alloc'd)
               + 2 * tm * f_pad * seq_isize      # out tile
               + tm * f_pad * 4)                 # f32 matmul result before cast
        if est <= budget:
            return dict(variant="nok", tm=tm, tn=f_pad, tk=n_pad,
                        n_pad=n_pad, f_pad=f_pad, vmem_limit=vmem_limit)

    # ---- Variant "kred": standard (i, j, k) tiling with large tiles.
    tm = 512 if n_pad % 512 == 0 else 256
    tk = next(t for t in (1024, 512, 256) if n_pad % t == 0)
    if f_pad <= 2048:
        tn = f_pad   # single j step: adj streamed exactly once per hop
    else:
        tn = next(t for t in (2048, 1024, 512, 256, 128) if f_pad % t == 0)
    return dict(variant="kred", tm=tm, tn=tn, tk=tk,
                n_pad=n_pad, f_pad=f_pad, vmem_limit=vmem_limit)


# --------------------------------------------------------------------------
# pallas_call wrappers
# --------------------------------------------------------------------------
@functools.partial(jax.jit, static_argnames=("hops", "vmem_limit"))
def _propagate_fused_small(adj, seq, *, hops, vmem_limit):
    N, F = seq.shape
    return pl.pallas_call(
        functools.partial(_fused_hops_kernel, hops=hops),
        out_shape=jax.ShapeDtypeStruct((N, F), seq.dtype),
        in_specs=[
            pl.BlockSpec(memory_space=pltpu.MemorySpace.VMEM),
            pl.BlockSpec(memory_space=pltpu.MemorySpace.VMEM),
        ],
        out_specs=pl.BlockSpec(memory_space=pltpu.MemorySpace.VMEM),
        compiler_params=pltpu.CompilerParams(vmem_limit_bytes=vmem_limit),
    )(adj, seq)


def _one_hop(adj_p, seq_p, *, variant, tm, tn, tk, vmem_limit):
    """One hop out = adj_p @ seq_p on padded (tile-multiple) operands."""
    Np, Kp = adj_p.shape
    _, Fp = seq_p.shape
    out_dtype = seq_p.dtype

    if variant == "nok":
        return pl.pallas_call(
            _mm_kernel_nok,
            out_shape=jax.ShapeDtypeStruct((Np, Fp), out_dtype),
            grid_spec=pltpu.PrefetchScalarGridSpec(
                num_scalar_prefetch=0,
                grid=(Np // tm,),
                in_specs=[
                    pl.BlockSpec((tm, Kp), lambda i: (i, 0)),   # adj row strip
                    pl.BlockSpec((Kp, Fp), lambda i: (0, 0)),   # resident seq
                ],
                out_specs=pl.BlockSpec((tm, Fp), lambda i: (i, 0)),
            ),
            compiler_params=pltpu.CompilerParams(
                dimension_semantics=("parallel",),
                vmem_limit_bytes=vmem_limit,
            ),
        )(adj_p, seq_p)

    # variant == "kred": (i, j, k) with reduction axis last.
    use_scratch = out_dtype != jnp.float32
    kernel = _mm_kernel_scratch if use_scratch else _mm_kernel_accum_out
    scratch = [pltpu.VMEM((tm, tn), jnp.float32)] if use_scratch else []
    return pl.pallas_call(
        kernel,
        out_shape=jax.ShapeDtypeStruct((Np, Fp), out_dtype),
        grid_spec=pltpu.PrefetchScalarGridSpec(
            num_scalar_prefetch=0,
            grid=(Np // tm, Fp // tn, Kp // tk),
            in_specs=[
                pl.BlockSpec((tm, tk), lambda i, j, k: (i, k)),  # adj tile
                pl.BlockSpec((tk, tn), lambda i, j, k: (k, j)),  # seq tile
            ],
            out_specs=pl.BlockSpec((tm, tn), lambda i, j, k: (i, j)),
            scratch_shapes=scratch,
        ),
        compiler_params=pltpu.CompilerParams(
            dimension_semantics=("parallel", "parallel", "arbitrary"),
            vmem_limit_bytes=vmem_limit,
        ),
    )(adj_p, seq_p)


@functools.partial(jax.jit, static_argnames=(
    "hops", "variant", "tm", "tn", "tk", "n_pad", "f_pad", "vmem_limit"))
def _run_tiled(adj, seq, *, hops, variant, tm, tn, tk, n_pad, f_pad, vmem_limit):
    """pad -> hop loop -> slice, all inside one jit (no per-hop dispatch gaps)."""
    N, F = seq.shape
    adj_p = jnp.pad(adj, ((0, n_pad - N), (0, n_pad - N)))
    seq_p = jnp.pad(seq, ((0, n_pad - N), (0, f_pad - F)))
    for _ in range(hops):
        seq_p = _one_hop(adj_p, seq_p, variant=variant, tm=tm, tn=tn, tk=tk,
                         vmem_limit=vmem_limit)
    return seq_p[:N, :F]


def gcn_propagate(adj, seq, propa_times=1):
    """seq <- adj @ seq, repeated `propa_times` times (dense path of GCN.forward)."""
    propa_times = int(propa_times)
    if propa_times <= 0:
        return seq

    N, F = seq.shape
    seq_isize = jnp.dtype(seq.dtype).itemsize
    adj_isize = jnp.dtype(adj.dtype).itemsize
    vmem_cap = _vmem_capacity_bytes()

    # ---- fused small path: adj + seq + f32 intermediate + out all in VMEM.
    fused_est = N * N * adj_isize + N * F * (2 * seq_isize + 4)
    fused_budget = min(int(vmem_cap * 0.6), 96 << 20)
    if fused_est <= fused_budget:
        limit = int(min(vmem_cap * 0.85, fused_est + (16 << 20)))
        return _propagate_fused_small(adj, seq, hops=propa_times, vmem_limit=limit)

    # ---- tiled path.
    plan = _plan_tiles(N, F, adj_isize, seq_isize, vmem_cap)
    return _run_tiled(adj, seq, hops=propa_times, **plan)


# --------------------------------------------------------------------------
# GCN module (mirrors the PyTorch module)
# --------------------------------------------------------------------------
class GCNPallas:
    def __init__(self, in_ft, out_ft, act="prelu", drop_prob=0.0, isBias=False,
                 compute_dtype=jnp.bfloat16, key=None):
        if key is None:
            key = jax.random.PRNGKey(0)
        # Parameters mirror the PyTorch module's __init__ but — exactly like
        # the reference forward() — they are never used.
        limit = (6.0 / (in_ft + out_ft)) ** 0.5  # xavier_uniform_
        self.fc1_weight = jax.random.uniform(
            key, (out_ft, in_ft), minval=-limit, maxval=limit, dtype=jnp.float32
        )
        self.prelu_alpha = jnp.float32(0.25) if act == "prelu" else None
        self.bias_1 = jnp.zeros((out_ft,), jnp.float32) if isBias else None
        self.drop_prob = drop_prob
        self.isBias = isBias
        # bf16 by default: halves the dominant N^2 adj HBM stream and uses the
        # MXU's native bf16 path on all gens; accumulation stays f32 in-kernel
        # and the result is cast back to the caller dtype.  Pass
        # compute_dtype=jnp.float32 (or None) for bit-faithful f32 propagation.
        self.compute_dtype = compute_dtype

    def forward(self, seq, adj, propa_times=1, sparse=False):
        # TODO(synk): sparse=True path (torch.spmm on a sparse adjacency) not
        # implemented; the dense matmul covers the default dense path.
        orig_dtype = seq.dtype
        if self.compute_dtype is not None:
            adj = adj.astype(self.compute_dtype)
            seq = seq.astype(self.compute_dtype)
        out = gcn_propagate(adj, seq, propa_times)
        return out.astype(orig_dtype)


# --------------------------------------------------------------------------
# Demo / correctness check
# --------------------------------------------------------------------------
if __name__ == "__main__":
    key = jax.random.PRNGKey(0)
    k_adj, k_seq, k_par, k_adj2, k_seq2 = jax.random.split(key, 5)

    # --- test 1: small graph -> fused all-hops-in-VMEM path -----------------
    N, in_ft, out_ft = 256, 128, 64
    adj = jax.random.uniform(k_adj, (N, N), dtype=jnp.float32)
    adj = adj / jnp.sum(adj, axis=1, keepdims=True)
    seq = jax.random.normal(k_seq, (N, in_ft), dtype=jnp.float32)
    ref = adj @ (adj @ seq)

    model_bf16 = GCNPallas(in_ft, out_ft, act="prelu", drop_prob=0.0,
                           isBias=False, key=k_par)  # default: bf16 compute
    out_bf16 = jax.block_until_ready(model_bf16.forward(seq, adj, propa_times=2))
    assert out_bf16.shape == (N, in_ft) and out_bf16.dtype == seq.dtype
    assert jnp.allclose(out_bf16, ref, atol=2e-2, rtol=5e-2)  # bf16 tolerance

    model_f32 = GCNPallas(in_ft, out_ft, act="prelu", drop_prob=0.0,
                          isBias=False, compute_dtype=jnp.float32, key=k_par)
    out_f32 = jax.block_until_ready(model_f32.forward(seq, adj, propa_times=2))
    assert jnp.allclose(out_f32, ref, atol=1e-3, rtol=1e-3)

    # --- test 2: non-tile-multiple graph -> exercise both tiled variants ----
    N2, F2 = 300, 160
    adj2 = jax.random.uniform(k_adj2, (N2, N2), dtype=jnp.float32)
    adj2 = adj2 / jnp.sum(adj2, axis=1, keepdims=True)
    seq2 = jax.random.normal(k_seq2, (N2, F2), dtype=jnp.float32)
    ref2 = adj2 @ (adj2 @ seq2)

    n_pad, f_pad = 512, 256
    vlim = 32 << 20

    out_nok = _run_tiled(adj2, seq2, hops=2, variant="nok", tm=256, tn=f_pad,
                         tk=n_pad, n_pad=n_pad, f_pad=f_pad, vmem_limit=vlim)
    out_nok = jax.block_until_ready(out_nok)
    assert out_nok.shape == (N2, F2)
    assert jnp.allclose(out_nok, ref2, atol=1e-3, rtol=1e-3)

    out_kred = _run_tiled(adj2, seq2, hops=2, variant="kred", tm=256, tn=256,
                          tk=256, n_pad=n_pad, f_pad=f_pad, vmem_limit=vlim)
    out_kred = jax.block_until_ready(out_kred)
    assert out_kred.shape == (N2, F2)
    assert jnp.allclose(out_kred, ref2, atol=1e-3, rtol=1e-3)

    print("KERNEL_OK")
</pallas_src>

<mosaic_0001>
module attributes {stable_mosaic.version = 11 : i64} {
  func.func @_fused_hops_kernel(%arg0: memref<256x256xbf16, #tpu.memory_space<vmem>>, %arg1: memref<256x128xbf16, #tpu.memory_space<vmem>>, %arg2: memref<256x128xbf16, #tpu.memory_space<vmem>>) attributes {dimension_semantics = [], scalar_prefetch = 0 : i64, scratch_operands = 0 : i64, tpu.core_type = #tpu.core_type<tc>} {
    %c0 = arith.constant 0 : index
    %c0_0 = arith.constant 0 : index
    %0 = vector.load %arg0[%c0, %c0_0] : memref<256x256xbf16, #tpu.memory_space<vmem>>, vector<256x256xbf16>
    %c0_1 = arith.constant 0 : index
    %c0_2 = arith.constant 0 : index
    %1 = vector.load %arg1[%c0_1, %c0_2] : memref<256x128xbf16, #tpu.memory_space<vmem>>, vector<256x128xbf16>
    %cst = arith.constant dense<0.000000e+00> : vector<256x128xf32>
    %2 = tpu.matmul %0, %1, %cst {dimension_numbers = #tpu.dot_dimension_numbers<[1], [0], [0], [1], [0, 0, 1, 1], [], []>} : vector<256x256xbf16>, vector<256x128xbf16>, vector<256x128xf32> -> vector<256x128xf32>
    %3 = arith.truncf %2 : vector<256x128xf32> to vector<256x128xbf16>
    %cst_3 = arith.constant dense<0.000000e+00> : vector<256x128xf32>
    %4 = tpu.matmul %0, %3, %cst_3 {dimension_numbers = #tpu.dot_dimension_numbers<[1], [0], [0], [1], [0, 0, 1, 1], [], []>} : vector<256x256xbf16>, vector<256x128xbf16>, vector<256x128xf32> -> vector<256x128xf32>
    %5 = arith.truncf %4 : vector<256x128xf32> to vector<256x128xbf16>
    %c0_4 = arith.constant 0 : index
    %c0_5 = arith.constant 0 : index
    %6 = vector.load %arg2[%c0_4, %c0_5] : memref<256x128xbf16, #tpu.memory_space<vmem>>, vector<256x128xbf16>
    tpu.vector_store %arg2[%c0_4, %c0_5], %5 {strides = array<i32>} : memref<256x128xbf16, #tpu.memory_space<vmem>>, vector<256x128xbf16>,
    return
  }
}

</mosaic_0001>

<llo_original>
// kernel: _propagate_fused_small.1
$region0: #{_propagate_fused_small.1}
  #allocation0 [shape = 'u32[]', space=smem, size = 0x4, offset = 0x4, fixed_abs, tag = 'smem constant byte address 0x4 - core index']
  #allocation1 [shape = 'u32[144,128]{1,0:T(1,128)}', space=vmem, size = 0x12000, scoped, tag = 'internal scratch']
  %s0 = inlined_call_operand.hbm [shape: bf16[256,256], index: 0, kind: input, shape index: {}]
  %s1 = inlined_call_operand.hbm [shape: bf16[256,128], index: 1, kind: input, shape index: {}]
  %s2 = inlined_call_operand.hbm [shape: bf16[256,128], index: 2, kind: output, shape index: {}]
  %s3 = sld [smem:[#allocation0]]
  $region26: #{_propagate_fused_small.1} parent=0
    _
  %s5 = ssub.s32 1, %s3
  %s6 = scalar_select 0, %s5, %s3
  $region1: #{_propagate_fused_small.1} parent=0
    #allocation2 [shape = 'u8[131072]{0}', space=vmem, size = 0x20000, scoped, tag = 'input window, operand 0, single buffered']
    #allocation3 [shape = 's32[1]{0}', space=sflag, size = 0x4, scoped, tag = 'scoped memory for _propagate_fused_small.1']
    #allocation4 [shape = 's32[1]{0}', space=sflag, size = 0x4, scoped, tag = 'scoped memory for _propagate_fused_small.1']
    #allocation5 [shape = 'u8[65536]{0}', space=vmem, size = 0x10000, scoped, tag = 'input window, operand 1, single buffered']
    #allocation6 [shape = 's32[1]{0}', space=sflag, size = 0x4, scoped, tag = 'scoped memory for _propagate_fused_small.1']
    #allocation7 [shape = 'u8[65536]{0}', space=vmem, size = 0x10000, scoped, tag = 'output window, operand 0, single buffered']
    %7 = vsyncpa [#allocation3], 0
    %8 = vsyncpa [#allocation6], 0
    %9 = vsyncpa [#allocation4], 0
    // Predicated region
    $region2: #{_propagate_fused_small.1} parent=1 // pred_check
      _
    $region3: #{_propagate_fused_small.1} parent=1 // pred_check_branch
      %11 = sbr.rel (0) target = $region5
    $region4: #{_propagate_fused_small.1} parent=1 // pred_region
      %s13 = ssub.s32 4096, 4096
      %14 = vsyncadd [#allocation3], %s13
      %s15 = sshll.u32 [#allocation2], 4
      %s16 = int_to_ptr.vmem [resolvable:$true] %s15
      %21 = dma.hbm_to_vmem [thread:$0]  %s0, 4096, %s16, [#allocation3], 128, 128, 8
    $region5: #{_propagate_fused_small.1} parent=1 // pred_fallthru
      _
    // Predicated region
    $region6: #{_propagate_fused_small.1} parent=1 // pred_check
      _
    $region7: #{_propagate_fused_small.1} parent=1 // pred_check_branch
      %23 = sbr.rel (0) target = $region9
    $region8: #{_propagate_fused_small.1} parent=1 // pred_region
      %s25 = ssub.s32 2048, 2048
      %26 = vsyncadd [#allocation6], %s25
      %s27 = sshll.u32 [#allocation5], 4
      %s28 = int_to_ptr.vmem [resolvable:$true] %s27
      %33 = dma.hbm_to_vmem [thread:$0]  %s1, 2048, %s28, [#allocation6], 64, 64, 4
    $region9: #{_propagate_fused_small.1} parent=1 // pred_fallthru
      _
    // Predicated region
    $region10: #{_propagate_fused_small.1} parent=1 // pred_check
      _
    $region11: #{_propagate_fused_small.1} parent=1 // pred_check_branch
      %35 = sbr.rel (0) target = $region13
    $region12: #{_propagate_fused_small.1} parent=1 // pred_region
      %36 = dma.done [#allocation3], 4096
    $region13: #{_propagate_fused_small.1} parent=1 // pred_fallthru
      _
    // Predicated region
    $region14: #{_propagate_fused_small.1} parent=1 // pred_check
      _
    $region15: #{_propagate_fused_small.1} parent=1 // pred_check_branch
      %38 = sbr.rel (0) target = $region17
    $region16: #{_propagate_fused_small.1} parent=1 // pred_region
      %39 = dma.done [#allocation6], 2048
    $region17: #{_propagate_fused_small.1} parent=1 // pred_fallthru
      _
    %v41 = vld [vmem:[#allocation2] sm:$0xff]
    %v42 = vld [vmem:[#allocation2 + $0x8] sm:$0xff]
    %v43 = vld [vmem:[#allocation2 + $0x10] sm:$0xff]
    %v44 = vld [vmem:[#allocation2 + $0x18] sm:$0xff]
    %v45 = vld [vmem:[#allocation2 + $0x20] sm:$0xff]
    %v46 = vld [vmem:[#allocation2 + $0x28] sm:$0xff]
    %v47 = vld [vmem:[#allocation2 + $0x30] sm:$0xff]
    %v48 = vld [vmem:[#allocation2 + $0x38] sm:$0xff]
    %v49 = vld [vmem:[#allocation2 + $0x40] sm:$0xff]
    %v50 = vld [vmem:[#allocation2 + $0x48] sm:$0xff]
    %v51 = vld [vmem:[#allocation2 + $0x50] sm:$0xff]
    %v52 = vld [vmem:[#allocation2 + $0x58] sm:$0xff]
    %v53 = vld [vmem:[#allocation2 + $0x60] sm:$0xff]
    %v54 = vld [vmem:[#allocation2 + $0x68] sm:$0xff]
    %v55 = vld [vmem:[#allocation2 + $0x70] sm:$0xff]
    %v56 = vld [vmem:[#allocation2 + $0x78] sm:$0xff]
    %v57 = vld [vmem:[#allocation2 + $0x80] sm:$0xff]
    %v58 = vld [vmem:[#allocation2 + $0x88] sm:$0xff]
    %v59 = vld [vmem:[#allocation2 + $0x90] sm:$0xff]
    %v60 = vld [vmem:[#allocation2 + $0x98] sm:$0xff]
    %v61 = vld [vmem:[#allocation2 + $0xa0] sm:$0xff]
    %v62 = vld [vmem:[#allocation2 + $0xa8] sm:$0xff]
    %v63 = vld [vmem:[#allocation2 + $0xb0] sm:$0xff]
    %v64 = vld [vmem:[#allocation2 + $0xb8] sm:$0xff]
    %v65 = vld [vmem:[#allocation2 + $0xc0] sm:$0xff]
    %v66 = vld [vmem:[#allocation2 + $0xc8] sm:$0xff]
    %v67 = vld [vmem:[#allocation2 + $0xd0] sm:$0xff]
    %v68 = vld [vmem:[#allocation2 + $0xd8] sm:$0xff]
    %v69 = vld [vmem:[#allocation2 + $0xe0] sm:$0xff]
    %v70 = vld [vmem:[#allocation2 + $0xe8] sm:$0xff]
    %v71 = vld [vmem:[#allocation2 + $0xf0] sm:$0xff]
    %v72 = vld [vmem:[#allocation2 + $0xf8] sm:$0xff]
    %v73 = vld [vmem:[#allocation5] sm:$0xf]
    %v74 = vld [vmem:[#allocation5 + $0x4] sm:$0xf]
    %v75 = vld [vmem:[#allocation5 + $0x8] sm:$0xf]
    %v76 = vld [vmem:[#allocation5 + $0xc] sm:$0xf]
    %v77 = vld [vmem:[#allocation5 + $0x10] sm:$0xf]
    %v78 = vld [vmem:[#allocation5 + $0x14] sm:$0xf]
    %v79 = vld [vmem:[#allocation5 + $0x18] sm:$0xf]
    %v80 = vld [vmem:[#allocation5 + $0x1c] sm:$0xf]
    %v81 = vld [vmem:[#allocation5 + $0x20] sm:$0xf]
    %v82 = vld [vmem:[#allocation5 + $0x24] sm:$0xf]
    %v83 = vld [vmem:[#allocation5 + $0x28] sm:$0xf]
    %v84 = vld [vmem:[#allocation5 + $0x2c] sm:$0xf]
    %v85 = vld [vmem:[#allocation5 + $0x30] sm:$0xf]
    %v86 = vld [vmem:[#allocation5 + $0x34] sm:$0xf]
    %v87 = vld [vmem:[#allocation5 + $0x38] sm:$0xf]
    %v88 = vld [vmem:[#allocation5 + $0x3c] sm:$0xf]
    %v89 = vld [vmem:[#allocation5 + $0x40] sm:$0xf]
    %v90 = vld [vmem:[#allocation5 + $0x44] sm:$0xf]
    %v91 = vld [vmem:[#allocation5 + $0x48] sm:$0xf]
    %v92 = vld [vmem:[#allocation5 + $0x4c] sm:$0xf]
    %v93 = vld [vmem:[#allocation5 + $0x50] sm:$0xf]
    %v94 = vld [vmem:[#allocation5 + $0x54] sm:$0xf]
    %v95 = vld [vmem:[#allocation5 + $0x58] sm:$0xf]
    %v96 = vld [vmem:[#allocation5 + $0x5c] sm:$0xf]
    %v97 = vld [vmem:[#allocation5 + $0x60] sm:$0xf]
    %v98 = vld [vmem:[#allocation5 + $0x64] sm:$0xf]
    %v99 = vld [vmem:[#allocation5 + $0x68] sm:$0xf]
    %v100 = vld [vmem:[#allocation5 + $0x6c] sm:$0xf]
    %v101 = vld [vmem:[#allocation5 + $0x70] sm:$0xf]
    %v102 = vld [vmem:[#allocation5 + $0x74] sm:$0xf]
    %v103 = vld [vmem:[#allocation5 + $0x78] sm:$0xf]
    %v104 = vld [vmem:[#allocation5 + $0x7c] sm:$0xf]
    %v137 = vunpack.c.l.b16 %v41
    %v138 = vunpack.c.h.b16 %v41
    %v139 = vunpack.c.l.b16 %v42
    %v140 = vunpack.c.h.b16 %v42
    %v141 = vunpack.c.l.b16 %v43
    %v142 = vunpack.c.h.b16 %v43
    %v143 = vunpack.c.l.b16 %v44
    %v144 = vunpack.c.h.b16 %v44
    %v145 = vunpack.c.l.b16 %v45
    %v146 = vunpack.c.h.b16 %v45
    %v147 = vunpack.c.l.b16 %v46
    %v148 = vunpack.c.h.b16 %v46
    %v149 = vunpack.c.l.b16 %v47
    %v150 = vunpack.c.h.b16 %v47
    %v151 = vunpack.c.l.b16 %v48
    %v152 = vunpack.c.h.b16 %v48
    %v153 = vunpack.c.l.b16 %v49
    %v154 = vunpack.c.h.b16 %v49
    %v155 = vunpack.c.l.b16 %v50
    %v156 = vunpack.c.h.b16 %v50
    %v157 = vunpack.c.l.b16 %v51
    %v158 = vunpack.c.h.b16 %v51
    %v159 = vunpack.c.l.b16 %v52
    %v160 = vunpack.c.h.b16 %v52
    %v161 = vunpack.c.l.b16 %v53
    %v162 = vunpack.c.h.b16 %v53
    %v163 = vunpack.c.l.b16 %v54
    %v164 = vunpack.c.h.b16 %v54
    %v165 = vunpack.c.l.b16 %v55
    %v166 = vunpack.c.h.b16 %v55
    %v167 = vunpack.c.l.b16 %v56
    %v168 = vunpack.c.h.b16 %v56
    %v169 = vunpack.c.l.b16 %v57
    %v170 = vunpack.c.h.b16 %v57
    %v171 = vunpack.c.l.b16 %v58
    %v172 = vunpack.c.h.b16 %v58
    %v173 = vunpack.c.l.b16 %v59
    %v174 = vunpack.c.h.b16 %v59
    %v175 = vunpack.c.l.b16 %v60
    %v176 = vunpack.c.h.b16 %v60
    %v177 = vunpack.c.l.b16 %v61
    %v178 = vunpack.c.h.b16 %v61
    %v179 = vunpack.c.l.b16 %v62
    %v180 = vunpack.c.h.b16 %v62
    %v181 = vunpack.c.l.b16 %v63
    %v182 = vunpack.c.h.b16 %v63
    %v183 = vunpack.c.l.b16 %v64
    %v184 = vunpack.c.h.b16 %v64
    %v185 = vunpack.c.l.b16 %v65
    %v186 = vunpack.c.h.b16 %v65
    %v187 = vunpack.c.l.b16 %v66
    %v188 = vunpack.c.h.b16 %v66
    %v189 = vunpack.c.l.b16 %v67
    %v190 = vunpack.c.h.b16 %v67
    %v191 = vunpack.c.l.b16 %v68
    %v192 = vunpack.c.h.b16 %v68
    %v193 = vunpack.c.l.b16 %v69
    %v194 = vunpack.c.h.b16 %v69
    %v195 = vunpack.c.l.b16 %v70
    %v196 = vunpack.c.h.b16 %v70
    %v197 = vunpack.c.l.b16 %v71
    %v198 = vunpack.c.h.b16 %v71
    %v199 = vunpack.c.l.b16 %v72
    %v200 = vunpack.c.h.b16 %v72
    %v201 = vpack.c.b16 %v139, %v137
    %v202 = vpack.c.b16 %v140, %v138
    %v203 = vpack.c.b16 %v143, %v141
    %v204 = vpack.c.b16 %v144, %v142
    %v205 = vpack.c.b16 %v147, %v145
    %v206 = vpack.c.b16 %v148, %v146
    %v207 = vpack.c.b16 %v151, %v149
    %v208 = vpack.c.b16 %v152, %v150
    %v209 = vpack.c.b16 %v155, %v153
    %v210 = vpack.c.b16 %v156, %v154
    %v211 = vpack.c.b16 %v159, %v157
    %v212 = vpack.c.b16 %v160, %v158
    %v213 = vpack.c.b16 %v163, %v161
    %v214 = vpack.c.b16 %v164, %v162
    %v215 = vpack.c.b16 %v167, %v165
    %v216 = vpack.c.b16 %v168, %v166
    %v217 = vpack.c.b16 %v171, %v169
    %v218 = vpack.c.b16 %v172, %v170
    %v219 = vpack.c.b16 %v175, %v173
    %v220 = vpack.c.b16 %v176, %v174
    %v221 = vpack.c.b16 %v179, %v177
    %v222 = vpack.c.b16 %v180, %v178
    %v223 = vpack.c.b16 %v183, %v181
    %v224 = vpack.c.b16 %v184, %v182
    %v225 = vpack.c.b16 %v187, %v185
    %v226 = vpack.c.b16 %v188, %v186
    %v227 = vpack.c.b16 %v191, %v189
    %v228 = vpack.c.b16 %v192, %v190
    %v229 = vpack.c.b16 %v195, %v193
    %v230 = vpack.c.b16 %v196, %v194
    %v231 = vpack.c.b16 %v199, %v197
    %v232 = vpack.c.b16 %v200, %v198
    %v297 = vunpack.c.l.b16 %v73
    %v298 = vunpack.c.l.b16 %v74
    %v299 = vunpack.c.l.b16 %v75
    %v300 = vunpack.c.l.b16 %v76
    %v301 = vunpack.c.l.b16 %v77
    %v302 = vunpack.c.l.b16 %v78
    %v303 = vunpack.c.l.b16 %v79
    %v304 = vunpack.c.l.b16 %v80
    %v305 = vunpack.c.l.b16 %v81
    %v306 = vunpack.c.l.b16 %v82
    %v307 = vunpack.c.l.b16 %v83
    %v308 = vunpack.c.l.b16 %v84
    %v309 = vunpack.c.l.b16 %v85
    %v310 = vunpack.c.l.b16 %v86
    %v311 = vunpack.c.l.b16 %v87
    %v312 = vunpack.c.l.b16 %v88
    %v313 = vunpack.c.l.b16 %v89
    %v314 = vunpack.c.l.b16 %v90
    %v315 = vunpack.c.l.b16 %v91
    %v316 = vunpack.c.l.b16 %v92
    %v317 = vunpack.c.l.b16 %v93
    %v318 = vunpack.c.l.b16 %v94
    %v319 = vunpack.c.l.b16 %v95
    %v320 = vunpack.c.l.b16 %v96
    %v321 = vunpack.c.l.b16 %v97
    %v322 = vunpack.c.l.b16 %v98
    %v323 = vunpack.c.l.b16 %v99
    %v324 = vunpack.c.l.b16 %v100
    %v325 = vunpack.c.l.b16 %v101
    %v326 = vunpack.c.l.b16 %v102
    %v327 = vunpack.c.l.b16 %v103
    %v328 = vunpack.c.l.b16 %v104
    %v329 = vpack.c.b16 %v298, %v297
    %v330 = vpack.c.b16 %v300, %v299
    %v331 = vpack.c.b16 %v302, %v301
    %v332 = vpack.c.b16 %v304, %v303
    %v333 = vpack.c.b16 %v306, %v305
    %v334 = vpack.c.b16 %v308, %v307
    %v335 = vpack.c.b16 %v310, %v309
    %v336 = vpack.c.b16 %v312, %v311
    %v337 = vpack.c.b16 %v314, %v313
    %v338 = vpack.c.b16 %v316, %v315
    %v339 = vpack.c.b16 %v318, %v317
    %v340 = vpack.c.b16 %v320, %v319
    %v341 = vpack.c.b16 %v322, %v321
    %v342 = vpack.c.b16 %v324, %v323
    %v343 = vpack.c.b16 %v326, %v325
    %v344 = vpack.c.b16 %v328, %v327
    %361 = vmatprep.subr.bf16.mxu0 0
    %362 = vmatpush1.bf16.msra.mxu0 %v329
    %363 = vmatprep.subr.bf16.mxu0 0
    %364 = vmatpush1.bf16.msra.mxu0 %v330
    %365 = vmatprep.subr.bf16.mxu0 0
    %366 = vmatpush1.bf16.msra.mxu0 %v331
    %367 = vmatprep.subr.bf16.mxu0 0
    %368 = vmatpush1.bf16.msra.mxu0 %v332
    %369 = vmatprep.subr.bf16.mxu0 0
    %370 = vmatpush1.bf16.msra.mxu0 %v333
    %371 = vmatprep.subr.bf16.mxu0 0
    %372 = vmatpush1.bf16.msra.mxu0 %v334
    %373 = vmatprep.subr.bf16.mxu0 0
    %374 = vmatpush1.bf16.msra.mxu0 %v335
    %375 = vmatprep.subr.bf16.mxu0 0
    %376 = vmatpush1.bf16.msra.mxu0 %v336
    %377 = vmatprep.subr.bf16.mxu0 0
    %378 = vmatpush1.bf16.msra.mxu0 %v337
    %379 = vmatprep.subr.bf16.mxu0 0
    %380 = vmatpush1.bf16.msra.mxu0 %v338
    %381 = vmatprep.subr.bf16.mxu0 0
    %382 = vmatpush1.bf16.msra.mxu0 %v339
    %383 = vmatprep.subr.bf16.mxu0 0
    %384 = vmatpush1.bf16.msra.mxu0 %v340
    %385 = vmatprep.subr.bf16.mxu0 0
    %386 = vmatpush1.bf16.msra.mxu0 %v341
    %387 = vmatprep.subr.bf16.mxu0 0
    %388 = vmatpush1.bf16.msra.mxu0 %v342
    %389 = vmatprep.subr.bf16.mxu0 0
    %390 = vmatpush1.bf16.msra.mxu0 %v343
    %391 = vmatprep.subr.bf16.mxu0 0
    %392 = vmatpush1.bf16.msra.mxu0 %v344
    %393 = vmatprep.mubr.bf16.mxu0 %v202
    %394 = vmatmul.mubr.bf16.gmra.mrb[0].mxu0 %v201
    %v395 = vpop.f32.mrb[0].mxu0
    %v396 = vadd.f32 0.0, %v395
    %v397 = vpop.f32.mrb[0].mxu0
    %v398 = vpop.f32.mrb[0].mxu0
    %v399 = vadd.f32 0.0, %v398
    %v400 = vpop.f32.mrb[0].mxu0
    %401 = vmatprep.mubr.bf16.mxu0 %v204
    %402 = vmatmul.mubr.bf16.gmra.mrb[0].mxu0 %v203
    %v403 = vpop.f32.mrb[0].mxu0
    %v404 = vadd.f32 0.0, %v403
    %v405 = vpop.f32.mrb[0].mxu0
    %v406 = vpop.f32.mrb[0].mxu0
    %v407 = vadd.f32 0.0, %v406
    %v408 = vpop.f32.mrb[0].mxu0
    %409 = vmatprep.mubr.bf16.mxu0 %v206
    %410 = vmatmul.mubr.bf16.gmra.mrb[0].mxu0 %v205
    %v411 = vpop.f32.mrb[0].mxu0
    %v412 = vadd.f32 0.0, %v411
    %v413 = vpop.f32.mrb[0].mxu0
    %v414 = vpop.f32.mrb[0].mxu0
    %v415 = vadd.f32 0.0, %v414
    %v416 = vpop.f32.mrb[0].mxu0
    %417 = vmatprep.mubr.bf16.mxu0 %v208
    %418 = vmatmul.mubr.bf16.gmra.mrb[0].mxu0 %v207
    %v419 = vpop.f32.mrb[0].mxu0
    %v420 = vadd.f32 0.0, %v419
    %v421 = vpop.f32.mrb[0].mxu0
    %v422 = vpop.f32.mrb[0].mxu0
    %v423 = vadd.f32 0.0, %v422
    %v424 = vpop.f32.mrb[0].mxu0
    %425 = vmatprep.mubr.bf16.mxu0 %v210
    %426 = vmatmul.mubr.bf16.gmra.mrb[0].mxu0 %v209
    %v427 = vpop.f32.mrb[0].mxu0
    %v428 = vadd.f32 0.0, %v427
    %v429 = vpop.f32.mrb[0].mxu0
    %v430 = vpop.f32.mrb[0].mxu0
    %v431 = vadd.f32 0.0, %v430
    %v432 = vpop.f32.mrb[0].mxu0
    %433 = vmatprep.mubr.bf16.mxu0 %v212
    %434 = vmatmul.mubr.bf16.gmra.mrb[0].mxu0 %v211
    %v435 = vpop.f32.mrb[0].mxu0
    %v436 = vadd.f32 0.0, %v435
    %v437 = vpop.f32.mrb[0].mxu0
    %v438 = vpop.f32.mrb[0].mxu0
    %v439 = vadd.f32 0.0, %v438
    %v440 = vpop.f32.mrb[0].mxu0
    %441 = vmatprep.mubr.bf16.mxu0 %v214
    %442 = vmatmul.mubr.bf16.gmra.mrb[0].mxu0 %v213
    %v443 = vpop.f32.mrb[0].mxu0
    %v444 = vadd.f32 0.0, %v443
    %v445 = vpop.f32.mrb[0].mxu0
    %v446 = vpop.f32.mrb[0].mxu0
    %v447 = vadd.f32 0.0, %v446
    %v448 = vpop.f32.mrb[0].mxu0
    %449 = vmatprep.mubr.bf16.mxu0 %v216
    %450 = vmatmul.mubr.bf16.gmra.mrb[0].mxu0 %v215
    %v451 = vpop.f32.mrb[0].mxu0
    %v452 = vadd.f32 0.0, %v451
    %v453 = vpop.f32.mrb[0].mxu0
    %v454 = vpop.f32.mrb[0].mxu0
    %v455 = vadd.f32 0.0, %v454
    %v456 = vpop.f32.mrb[0].mxu0
    %457 = vmatprep.mubr.bf16.mxu0 %v218
    %458 = vmatmul.mubr.bf16.gmra.mrb[0].mxu0 %v217
    %v459 = vpop.f32.mrb[0].mxu0
    %v460 = vadd.f32 0.0, %v459
    %v461 = vpop.f32.mrb[0].mxu0
    %v462 = vpop.f32.mrb[0].mxu0
    %v463 = vadd.f32 0.0, %v462
    %v464 = vpop.f32.mrb[0].mxu0
    %465 = vmatprep.mubr.bf16.mxu0 %v220
    %466 = vmatmul.mubr.bf16.gmra.mrb[0].mxu0 %v219
    %v467 = vpop.f32.mrb[0].mxu0
    %v468 = vadd.f32 0.0, %v467
    %v469 = vpop.f32.mrb[0].mxu0
    %v470 = vpop.f32.mrb[0].mxu0
    %v471 = vadd.f32 0.0, %v470
    %v472 = vpop.f32.mrb[0].mxu0
    %473 = vmatprep.mubr.bf16.mxu0 %v222
    %474 = vmatmul.mubr.bf16.gmra.mrb[0].mxu0 %v221
    %v475 = vpop.f32.mrb[0].mxu0
    %v476 = vadd.f32 0.0, %v475
    %v477 = vpop.f32.mrb[0].mxu0
    %v478 = vpop.f32.mrb[0].mxu0
    %v479 = vadd.f32 0.0, %v478
    %v480 = vpop.f32.mrb[0].mxu0
    %481 = vmatprep.mubr.bf16.mxu0 %v224
    %482 = vmatmul.mubr.bf16.gmra.mrb[0].mxu0 %v223
    %v483 = vpop.f32.mrb[0].mxu0
    %v484 = vadd.f32 0.0, %v483
    %v485 = vpop.f32.mrb[0].mxu0
    %v486 = vpop.f32.mrb[0].mxu0
    %v487 = vadd.f32 0.0, %v486
    %v488 = vpop.f32.mrb[0].mxu0
    %489 = vmatprep.mubr.bf16.mxu0 %v226
    %490 = vmatmul.mubr.bf16.gmra.mrb[0].mxu0 %v225
    %v491 = vpop.f32.mrb[0].mxu0
    %v492 = vadd.f32 0.0, %v491
    %v493 = vpop.f32.mrb[0].mxu0
    %v494 = vpop.f32.mrb[0].mxu0
    %v495 = vadd.f32 0.0, %v494
    %v496 = vpop.f32.mrb[0].mxu0
    %497 = vmatprep.mubr.bf16.mxu0 %v228
    %498 = vmatmul.mubr.bf16.gmra.mrb[0].mxu0 %v227
    %v499 = vpop.f32.mrb[0].mxu0
    %v500 = vadd.f32 0.0, %v499
    %v501 = vpop.f32.mrb[0].mxu0
    %v502 = vpop.f32.mrb[0].mxu0
    %v503 = vadd.f32 0.0, %v502
    %v504 = vpop.f32.mrb[0].mxu0
    %505 = vmatprep.mubr.bf16.mxu0 %v230
    %506 = vmatmul.mubr.bf16.gmra.mrb[0].mxu0 %v229
    %v507 = vpop.f32.mrb[0].mxu0
    %v508 = vadd.f32 0.0, %v507
    %v509 = vpop.f32.mrb[0].mxu0
    %v510 = vpop.f32.mrb[0].mxu0
    %v511 = vadd.f32 0.0, %v510
    %v512 = vpop.f32.mrb[0].mxu0
    %513 = vmatprep.mubr.bf16.mxu0 %v232
    %514 = vmatmul.mubr.bf16.gmra.mrb[0].mxu0 %v231
    %v515 = vpop.f32.mrb[0].mxu0
    %v516 = vadd.f32 0.0, %v515
    %v517 = vpop.f32.mrb[0].mxu0
    %v518 = vpop.f32.mrb[0].mxu0
    %v519 = vadd.f32 0.0, %v518
    %v520 = vpop.f32.mrb[0].mxu0
    %521 = vdwg.mxu0
    %v522 = vpack.c.bf16 %v399, %v396
    %v523 = vpack.c.bf16 %v407, %v404
    %v524 = vpack.c.bf16 %v415, %v412
    %v525 = vpack.c.bf16 %v423, %v420
    %v526 = vpack.c.bf16 %v431, %v428
    %v527 = vpack.c.bf16 %v439, %v436
    %v528 = vpack.c.bf16 %v447, %v444
    %v529 = vpack.c.bf16 %v455, %v452
    %v530 = vpack.c.bf16 %v463, %v460
    %v531 = vpack.c.bf16 %v471, %v468
    %v532 = vpack.c.bf16 %v479, %v476
    %v533 = vpack.c.bf16 %v487, %v484
    %v534 = vpack.c.bf16 %v495, %v492
    %v535 = vpack.c.bf16 %v503, %v500
    %v536 = vpack.c.bf16 %v511, %v508
    %v537 = vpack.c.bf16 %v519, %v516
    %538 = vmatprep.subr.bf16.mxu0 0
    %539 = vmatpush1.bf16.msra.mxu0 %v522
    %540 = vmatprep.subr.bf16.mxu0 0
    %541 = vmatpush1.bf16.msra.mxu0 %v523
    %542 = vmatprep.subr.bf16.mxu0 0
    %543 = vmatpush1.bf16.msra.mxu0 %v524
    %544 = vmatprep.subr.bf16.mxu0 0
    %545 = vmatpush1.bf16.msra.mxu0 %v525
    %546 = vmatprep.subr.bf16.mxu0 0
    %547 = vmatpush1.bf16.msra.mxu0 %v526
    %548 = vmatprep.subr.bf16.mxu0 0
    %549 = vmatpush1.bf16.msra.mxu0 %v527
    %550 = vmatprep.subr.bf16.mxu0 0
    %551 = vmatpush1.bf16.msra.mxu0 %v528
    %552 = vmatprep.subr.bf16.mxu0 0
    %553 = vmatpush1.bf16.msra.mxu0 %v529
    %554 = vmatprep.subr.bf16.mxu0 0
    %555 = vmatpush1.bf16.msra.mxu0 %v530
    %556 = vmatprep.subr.bf16.mxu0 0
    %557 = vmatpush1.bf16.msra.mxu0 %v531
    %558 = vmatprep.subr.bf16.mxu0 0
    %559 = vmatpush1.bf16.msra.mxu0 %v532
    %560 = vmatprep.subr.bf16.mxu0 0
    %561 = vmatpush1.bf16.msra.mxu0 %v533
    %562 = vmatprep.subr.bf16.mxu0 0
    %563 = vmatpush1.bf16.msra.mxu0 %v534
    %564 = vmatprep.subr.bf16.mxu0 0
    %565 = vmatpush1.bf16.msra.mxu0 %v535
    %566 = vmatprep.subr.bf16.mxu0 0
    %567 = vmatpush1.bf16.msra.mxu0 %v536
    %568 = vmatprep.subr.bf16.mxu0 0
    %569 = vmatpush1.bf16.msra.mxu0 %v537
    %570 = vmatprep.mubr.bf16.mxu0 %v202
    %571 = vmatmul.mubr.bf16.gmra.mrb[0].mxu0 %v201
    %v572 = vpop.f32.mrb[0].mxu0
    %v573 = vadd.f32 0.0, %v572
    %v574 = vpop.f32.mrb[0].mxu0
    %v575 = vpop.f32.mrb[0].mxu0
    %v576 = vadd.f32 0.0, %v575
    %v577 = vpop.f32.mrb[0].mxu0
    %578 = vmatprep.mubr.bf16.mxu0 %v204
    %579 = vmatmul.mubr.bf16.gmra.mrb[0].mxu0 %v203
    %v580 = vpop.f32.mrb[0].mxu0
    %v581 = vadd.f32 0.0, %v580
    %v582 = vpop.f32.mrb[0].mxu0
    %v583 = vpop.f32.mrb[0].mxu0
    %v584 = vadd.f32 0.0, %v583
    %v585 = vpop.f32.mrb[0].mxu0
    %586 = vmatprep.mubr.bf16.mxu0 %v206
    %587 = vmatmul.mubr.bf16.gmra.mrb[0].mxu0 %v205
    %v588 = vpop.f32.mrb[0].mxu0
    %v589 = vadd.f32 0.0, %v588
    %v590 = vpop.f32.mrb[0].mxu0
    %v591 = vpop.f32.mrb[0].mxu0
    %v592 = vadd.f32 0.0, %v591
    %v593 = vpop.f32.mrb[0].mxu0
    %594 = vmatprep.mubr.bf16.mxu0 %v208
    %595 = vmatmul.mubr.bf16.gmra.mrb[0].mxu0 %v207
    %v596 = vpop.f32.mrb[0].mxu0
    %v597 = vadd.f32 0.0, %v596
    %v598 = vpop.f32.mrb[0].mxu0
    %v599 = vpop.f32.mrb[0].mxu0
    %v600 = vadd.f32 0.0, %v599
    %v601 = vpop.f32.mrb[0].mxu0
    %602 = vmatprep.mubr.bf16.mxu0 %v210
    %603 = vmatmul.mubr.bf16.gmra.mrb[0].mxu0 %v209
    %v604 = vpop.f32.mrb[0].mxu0
    %v605 = vadd.f32 0.0, %v604
    %v606 = vpop.f32.mrb[0].mxu0
    %v607 = vpop.f32.mrb[0].mxu0
    %v608 = vadd.f32 0.0, %v607
    %v609 = vpop.f32.mrb[0].mxu0
    %610 = vmatprep.mubr.bf16.mxu0 %v212
    %611 = vmatmul.mubr.bf16.gmra.mrb[0].mxu0 %v211
    %v612 = vpop.f32.mrb[0].mxu0
    %v613 = vadd.f32 0.0, %v612
    %v614 = vpop.f32.mrb[0].mxu0
    %v615 = vpop.f32.mrb[0].mxu0
    %v616 = vadd.f32 0.0, %v615
    %v617 = vpop.f32.mrb[0].mxu0
    %618 = vmatprep.mubr.bf16.mxu0 %v214
    %619 = vmatmul.mubr.bf16.gmra.mrb[0].mxu0 %v213
    %v620 = vpop.f32.mrb[0].mxu0
    %v621 = vadd.f32 0.0, %v620
    %v622 = vpop.f32.mrb[0].mxu0
    %v623 = vpop.f32.mrb[0].mxu0
    %v624 = vadd.f32 0.0, %v623
    %v625 = vpop.f32.mrb[0].mxu0
    %626 = vmatprep.mubr.bf16.mxu0 %v216
    %627 = vmatmul.mubr.bf16.gmra.mrb[0].mxu0 %v215
    %v628 = vpop.f32.mrb[0].mxu0
    %v629 = vadd.f32 0.0, %v628
    %v630 = vpop.f32.mrb[0].mxu0
    %v631 = vpop.f32.mrb[0].mxu0
    %v632 = vadd.f32 0.0, %v631
    %v633 = vpop.f32.mrb[0].mxu0
    %634 = vmatprep.mubr.bf16.mxu0 %v218
    %635 = vmatmul.mubr.bf16.gmra.mrb[0].mxu0 %v217
    %v636 = vpop.f32.mrb[0].mxu0
    %v637 = vadd.f32 0.0, %v636
    %v638 = vpop.f32.mrb[0].mxu0
    %v639 = vpop.f32.mrb[0].mxu0
    %v640 = vadd.f32 0.0, %v639
    %v641 = vpop.f32.mrb[0].mxu0
    %642 = vmatprep.mubr.bf16.mxu0 %v220
    %643 = vmatmul.mubr.bf16.gmra.mrb[0].mxu0 %v219
    %v644 = vpop.f32.mrb[0].mxu0
    %v645 = vadd.f32 0.0, %v644
    %v646 = vpop.f32.mrb[0].mxu0
    %v647 = vpop.f32.mrb[0].mxu0
    %v648 = vadd.f32 0.0, %v647
    %v649 = vpop.f32.mrb[0].mxu0
    %650 = vmatprep.mubr.bf16.mxu0 %v222
    %651 = vmatmul.mubr.bf16.gmra.mrb[0].mxu0 %v221
    %v652 = vpop.f32.mrb[0].mxu0
    %v653 = vadd.f32 0.0, %v652
    %v654 = vpop.f32.mrb[0].mxu0
    %v655 = vpop.f32.mrb[0].mxu0
    %v656 = vadd.f32 0.0, %v655
    %v657 = vpop.f32.mrb[0].mxu0
    %658 = vmatprep.mubr.bf16.mxu0 %v224
    %659 = vmatmul.mubr.bf16.gmra.mrb[0].mxu0 %v223
    %v660 = vpop.f32.mrb[0].mxu0
    %v661 = vadd.f32 0.0, %v660
    %v662 = vpop.f32.mrb[0].mxu0
    %v663 = vpop.f32.mrb[0].mxu0
    %v664 = vadd.f32 0.0, %v663
    %v665 = vpop.f32.mrb[0].mxu0
    %666 = vmatprep.mubr.bf16.mxu0 %v226
    %667 = vmatmul.mubr.bf16.gmra.mrb[0].mxu0 %v225
    %v668 = vpop.f32.mrb[0].mxu0
    %v669 = vadd.f32 0.0, %v668
    %v670 = vpop.f32.mrb[0].mxu0
    %v671 = vpop.f32.mrb[0].mxu0
    %v672 = vadd.f32 0.0, %v671
    %v673 = vpop.f32.mrb[0].mxu0
    %674 = vmatprep.mubr.bf16.mxu0 %v228
    %675 = vmatmul.mubr.bf16.gmra.mrb[0].mxu0 %v227
    %v676 = vpop.f32.mrb[0].mxu0
    %v677 = vadd.f32 0.0, %v676
    %v678 = vpop.f32.mrb[0].mxu0
    %v679 = vpop.f32.mrb[0].mxu0
    %v680 = vadd.f32 0.0, %v679
    %v681 = vpop.f32.mrb[0].mxu0
    %682 = vmatprep.mubr.bf16.mxu0 %v230
    %683 = vmatmul.mubr.bf16.gmra.mrb[0].mxu0 %v229
    %v684 = vpop.f32.mrb[0].mxu0
    %v685 = vadd.f32 0.0, %v684
    %v686 = vpop.f32.mrb[0].mxu0
    %v687 = vpop.f32.mrb[0].mxu0
    %v688 = vadd.f32 0.0, %v687
    %v689 = vpop.f32.mrb[0].mxu0
    %690 = vmatprep.mubr.bf16.mxu0 %v232
    %691 = vmatmul.mubr.bf16.gmra.mrb[0].mxu0 %v231
    %v692 = vpop.f32.mrb[0].mxu0
    %v693 = vadd.f32 0.0, %v692
    %v694 = vpop.f32.mrb[0].mxu0
    %v695 = vpop.f32.mrb[0].mxu0
    %v696 = vadd.f32 0.0, %v695
    %v697 = vpop.f32.mrb[0].mxu0
    %698 = vdwg.mxu0
    %v699 = vpack.c.bf16 %v576, %v573
    %v700 = vpack.c.bf16 %v584, %v581
    %v701 = vpack.c.bf16 %v592, %v589
    %v702 = vpack.c.bf16 %v600, %v597
    %v703 = vpack.c.bf16 %v608, %v605
    %v704 = vpack.c.bf16 %v616, %v613
    %v705 = vpack.c.bf16 %v624, %v621
    %v706 = vpack.c.bf16 %v632, %v629
    %v707 = vpack.c.bf16 %v640, %v637
    %v708 = vpack.c.bf16 %v648, %v645
    %v709 = vpack.c.bf16 %v656, %v653
    %v710 = vpack.c.bf16 %v664, %v661
    %v711 = vpack.c.bf16 %v672, %v669
    %v712 = vpack.c.bf16 %v680, %v677
    %v713 = vpack.c.bf16 %v688, %v685
    %v714 = vpack.c.bf16 %v696, %v693
    %v731 = vunpack.c.l.b16 %v699
    %v732 = vunpack.c.h.b16 %v699
    %v733 = vunpack.c.l.b16 %v700
    %v734 = vunpack.c.h.b16 %v700
    %v735 = vunpack.c.l.b16 %v701
    %v736 = vunpack.c.h.b16 %v701
    %v737 = vunpack.c.l.b16 %v702
    %v738 = vunpack.c.h.b16 %v702
    %v739 = vunpack.c.l.b16 %v703
    %v740 = vunpack.c.h.b16 %v703
    %v741 = vunpack.c.l.b16 %v704
    %v742 = vunpack.c.h.b16 %v704
    %v743 = vunpack.c.l.b16 %v705
    %v744 = vunpack.c.h.b16 %v705
    %v745 = vunpack.c.l.b16 %v706
    %v746 = vunpack.c.h.b16 %v706
    %v747 = vunpack.c.l.b16 %v707
    %v748 = vunpack.c.h.b16 %v707
    %v749 = vunpack.c.l.b16 %v708
    %v750 = vunpack.c.h.b16 %v708
    %v751 = vunpack.c.l.b16 %v709
    %v752 = vunpack.c.h.b16 %v709
    %v753 = vunpack.c.l.b16 %v710
    %v754 = vunpack.c.h.b16 %v710
    %v755 = vunpack.c.l.b16 %v711
    %v756 = vunpack.c.h.b16 %v711
    %v757 = vunpack.c.l.b16 %v712
    %v758 = vunpack.c.h.b16 %v712
    %v759 = vunpack.c.l.b16 %v713
    %v760 = vunpack.c.h.b16 %v713
    %v761 = vunpack.c.l.b16 %v714
    %v762 = vunpack.c.h.b16 %v714
    %v763 = vpack.c.b16 %v731, %v731
    %v764 = vpack.c.b16 %v732, %v732
    %v765 = vpack.c.b16 %v733, %v733
    %v766 = vpack.c.b16 %v734, %v734
    %v767 = vpack.c.b16 %v735, %v735
    %v768 = vpack.c.b16 %v736, %v736
    %v769 = vpack.c.b16 %v737, %v737
    %v770 = vpack.c.b16 %v738, %v738
    %v771 = vpack.c.b16 %v739, %v739
    %v772 = vpack.c.b16 %v740, %v740
    %v773 = vpack.c.b16 %v741, %v741
    %v774 = vpack.c.b16 %v742, %v742
    %v775 = vpack.c.b16 %v743, %v743
    %v776 = vpack.c.b16 %v744, %v744
    %v777 = vpack.c.b16 %v745, %v745
    %v778 = vpack.c.b16 %v746, %v746
    %v779 = vpack.c.b16 %v747, %v747
    %v780 = vpack.c.b16 %v748, %v748
    %v781 = vpack.c.b16 %v749, %v749
    %v782 = vpack.c.b16 %v750, %v750
    %v783 = vpack.c.b16 %v751, %v751
    %v784 = vpack.c.b16 %v752, %v752
    %v785 = vpack.c.b16 %v753, %v753
    %v786 = vpack.c.b16 %v754, %v754
    %v787 = vpack.c.b16 %v755, %v755
    %v788 = vpack.c.b16 %v756, %v756
    %v789 = vpack.c.b16 %v757, %v757
    %v790 = vpack.c.b16 %v758, %v758
    %v791 = vpack.c.b16 %v759, %v759
    %v792 = vpack.c.b16 %v760, %v760
    %v793 = vpack.c.b16 %v761, %v761
    %v794 = vpack.c.b16 %v762, %v762
    %827 = vst [vmem:[#allocation7] sm:$0xf] %v763
    %828 = vst [vmem:[#allocation7 + $0x4] sm:$0xf] %v764
    %829 = vst [vmem:[#allocation7 + $0x8] sm:$0xf] %v765
    %830 = vst [vmem:[#allocation7 + $0xc] sm:$0xf] %v766
    %831 = vst [vmem:[#allocation7 + $0x10] sm:$0xf] %v767
    %832 = vst [vmem:[#allocation7 + $0x14] sm:$0xf] %v768
    %833 = vst [vmem:[#allocation7 + $0x18] sm:$0xf] %v769
    %834 = vst [vmem:[#allocation7 + $0x1c] sm:$0xf] %v770
    %835 = vst [vmem:[#allocation7 + $0x20] sm:$0xf] %v771
    %836 = vst [vmem:[#allocation7 + $0x24] sm:$0xf] %v772
    %837 = vst [vmem:[#allocation7 + $0x28] sm:$0xf] %v773
    %838 = vst [vmem:[#allocation7 + $0x2c] sm:$0xf] %v774
    %839 = vst [vmem:[#allocation7 + $0x30] sm:$0xf] %v775
    %840 = vst [vmem:[#allocation7 + $0x34] sm:$0xf] %v776
    %841 = vst [vmem:[#allocation7 + $0x38] sm:$0xf] %v777
    %842 = vst [vmem:[#allocation7 + $0x3c] sm:$0xf] %v778
    %843 = vst [vmem:[#allocation7 + $0x40] sm:$0xf] %v779
    %844 = vst [vmem:[#allocation7 + $0x44] sm:$0xf] %v780
    %845 = vst [vmem:[#allocation7 + $0x48] sm:$0xf] %v781
    %846 = vst [vmem:[#allocation7 + $0x4c] sm:$0xf] %v782
    %847 = vst [vmem:[#allocation7 + $0x50] sm:$0xf] %v783
    %848 = vst [vmem:[#allocation7 + $0x54] sm:$0xf] %v784
    %849 = vst [vmem:[#allocation7 + $0x58] sm:$0xf] %v785
    %850 = vst [vmem:[#allocation7 + $0x5c] sm:$0xf] %v786
    %851 = vst [vmem:[#allocation7 + $0x60] sm:$0xf] %v787
    %852 = vst [vmem:[#allocation7 + $0x64] sm:$0xf] %v788
    %853 = vst [vmem:[#allocation7 + $0x68] sm:$0xf] %v789
    %854 = vst [vmem:[#allocation7 + $0x6c] sm:$0xf] %v790
    %855 = vst [vmem:[#allocation7 + $0x70] sm:$0xf] %v791
    %856 = vst [vmem:[#allocation7 + $0x74] sm:$0xf] %v792
    %857 = vst [vmem:[#allocation7 + $0x78] sm:$0xf] %v793
    %858 = vst [vmem:[#allocation7 + $0x7c] sm:$0xf] %v794
    // Predicated region
    $region18: #{_propagate_fused_small.1} parent=1 // pred_check
      _
    $region19: #{_propagate_fused_small.1} parent=1 // pred_check_branch
      %860 = sbr.rel (0) target = $region21
    $region20: #{_propagate_fused_small.1} parent=1 // pred_region
      %s862 = ssub.s32 2048, 2048
      %863 = vsyncadd [#allocation4], %s862
      %s864 = sshll.u32 [#allocation7], 4
      %s865 = int_to_ptr.vmem [resolvable:$true] %s864
      %870 = dma.vmem_to_hbm [thread:$0]  %s865, 2048, %s2, [#allocation4], 64, 64, 4
    $region21: #{_propagate_fused_small.1} parent=1 // pred_fallthru
      _
    // Predicated region
    $region22: #{_propagate_fused_small.1} parent=1 // pred_check
      _
    $region23: #{_propagate_fused_small.1} parent=1 // pred_check_branch
      %872 = sbr.rel (0) target = $region25
    $region24: #{_propagate_fused_small.1} parent=1 // pred_region
      %873 = dma.done [#allocation4], 2048
    $region25: #{_propagate_fused_small.1} parent=1 // pred_fallthru
      _
    %874 = vsyncpa [#allocation3], 1
    %875 = vsyncpa [#allocation6], 1
    %876 = vsyncpa [#allocation4], 1

</llo_original>
